<compile_context>
chip_gen: v7x
topology: tpu7x:2x2x1
jax: 0.10.0
libtpu: 0.0.40
codegen_flags: <defaults>
</compile_context>

<pallas_src>
import jax
import jax.numpy as jnp
from jax.experimental import pallas as pl
from jax.experimental.pallas import tpu as pltpu


_ACTS = {
    None: lambda v: v,
    'relu': lambda v: jnp.maximum(v, 0.0),
    'sigmoid': jax.nn.sigmoid,
    'exp': jnp.exp,
    'softplus': jax.nn.softplus,
    'tanh': jnp.tanh,
}


def _round_up(x, m):
    return (x + m - 1) // m * m


def _pick_tile(dim, cap, align):
    """Pick (tile, padded_dim) for one array axis.

    If the axis fits under `cap`, use a single full-dim block (no padding, no
    trailing slice).  Otherwise pad to a multiple of `align` and pick the
    largest `align`-multiple tile <= cap that divides the padded size.
    """
    if dim <= cap:
        return dim, dim
    padded = _round_up(dim, align)
    t = (cap // align) * align
    while t > align and padded % t != 0:
        t -= align
    return t, padded


def _detect_vmem_cap():
    """Usable VMEM budget: physical capacity minus headroom for Mosaic scratch."""
    cap = 64 * 1024 * 1024                      # conservative default (v7x size)
    try:
        detected = int(pltpu.get_tpu_info().vmem_capacity_bytes)
        if detected > 0:
            cap = detected
    except Exception:                           # older jax / no device info
        pass
    return max(32 * 1024 * 1024, cap - 16 * 1024 * 1024)


def _make_kernel(bn_fused, activate, eps):
    act = _ACTS[activate]

    def kernel(x_ref, w_ref, b_ref, o_ref, acc_ref):
        k = pl.program_id(2)

        @pl.when(k == 0)
        def _init():
            acc_ref[...] = jnp.zeros_like(acc_ref)

        # Plain (TM,TK)@(TK,TN) MXU matmul (weight pre-transposed once in the
        # wrapper); f32 accumulation in VMEM scratch.
        acc_ref[...] += jnp.dot(x_ref[...], w_ref[...],
                                preferred_element_type=jnp.float32)

        @pl.when(k == pl.num_programs(2) - 1)
        def _finalize():
            y = acc_ref[...] + b_ref[...]        # bias added once at the end
            if bn_fused:
                # BatchNorm1d, training-mode batch stats, gamma=1 / beta=0.
                # Two-pass variance E[(y-mean)^2] on the resident tile: the
                # extra XLU reduce is nearly free and avoids the E[y^2]-E[y]^2
                # cancellation that can drive var slightly negative.
                mean = jnp.mean(y, axis=0, keepdims=True)
                centered = y - mean
                var = jnp.mean(centered * centered, axis=0, keepdims=True)
                y = centered * jax.lax.rsqrt(var + eps)
            y = act(y)
            # TODO(synk): dropout (p != 0, training mode) would use
            # pltpu.prng_seed + pltpu.stateful_bernoulli; default p=0.0 -> no-op.
            o_ref[...] = y.astype(o_ref.dtype)

    return kernel


def _fc_forward_impl(x, w, b, *, f_out, tk, tn, tm_cap, bn_fused, activate,
                     eps, out_dtype, vmem_cap, weight_buffers):
    B, f_in = x.shape
    Kp, Np = w.shape

    if x.dtype != w.dtype:
        x = x.astype(w.dtype)                    # match the prepared weight dtype
    if Kp != f_in:                               # only for large, non-128-multiple K
        x = jnp.pad(x, ((0, 0), (0, Kp - f_in)))

    if bn_fused:
        TM, Bp = B, B                            # batch stats need the whole batch
    else:
        TM, Bp = _pick_tile(B, tm_cap, 8)
        # Megacore: if the layer collapsed to a single (M, N) block, split M so
        # v7x's second TensorCore gets work.
        if Np == tn and Bp == TM and TM % 16 == 0:
            TM //= 2
    if Bp != B:
        x = jnp.pad(x, ((0, Bp - B), (0, 0)))

    grid = (Bp // TM, Np // tn, Kp // tk)

    xb = jnp.dtype(x.dtype).itemsize
    ob = jnp.dtype(out_dtype).itemsize
    need = (2 * (TM * tk * xb + tk * tn * xb + tn * 4 + TM * tn * ob)
            + TM * tn * 4)
    vmem_limit = int(min(max(2 * need, 32 * 1024 * 1024), vmem_cap))

    w_spec_kwargs = {}
    if weight_buffers != 2:                      # deeper weight prefetch on demand
        w_spec_kwargs['pipeline_mode'] = pl.Buffered(weight_buffers)

    out = pl.pallas_call(
        _make_kernel(bn_fused, activate, eps),
        out_shape=jax.ShapeDtypeStruct((Bp, Np), out_dtype),
        grid_spec=pltpu.PrefetchScalarGridSpec(
            num_scalar_prefetch=0,
            grid=grid,
            in_specs=[
                pl.BlockSpec((TM, tk), lambda i, j, k: (i, k)),    # x tile
                pl.BlockSpec((tk, tn), lambda i, j, k: (k, j),     # weight tile
                             **w_spec_kwargs),
                pl.BlockSpec((1, tn), lambda i, j, k: (0, j)),     # bias (K-resident)
            ],
            out_specs=pl.BlockSpec((TM, tn), lambda i, j, k: (i, j)),
            scratch_shapes=[pltpu.VMEM((TM, tn), jnp.float32)],
        ),
        compiler_params=pltpu.CompilerParams(
            dimension_semantics=("parallel", "parallel", "arbitrary"),
            vmem_limit_bytes=vmem_limit),
    )(x, w, b)

    if Bp != B or Np != f_out:                   # only when padding was unavoidable
        out = out[:B, :f_out]
    return out


def _fc_bn_fallback_impl(x, w, b, *, f_out, tk, tn, tm_cap, activate, eps,
                         out_dtype, vmem_cap, weight_buffers):
    """bn=True for batches too large for a single resident batch tile.

    The matmul stays in Pallas (tiled M); batch statistics + normalize +
    activation are streamed by XLA (two extra O(B*N) passes over y).
    """
    y = _fc_forward_impl(x, w, b, f_out=f_out, tk=tk, tn=tn, tm_cap=tm_cap,
                         bn_fused=False, activate=None, eps=eps,
                         out_dtype=jnp.dtype(jnp.float32),
                         vmem_cap=vmem_cap, weight_buffers=weight_buffers)
    mean = jnp.mean(y, axis=0, keepdims=True)
    var = jnp.mean(jnp.square(y - mean), axis=0, keepdims=True)
    y = (y - mean) * jax.lax.rsqrt(var + eps)
    return _ACTS[activate](y).astype(out_dtype)


_STATIC = ("f_out", "tk", "tn", "tm_cap", "bn_fused", "activate", "eps",
           "out_dtype", "vmem_cap", "weight_buffers")
_fc_forward = jax.jit(_fc_forward_impl, static_argnames=_STATIC)
_fc_bn_fallback = jax.jit(
    _fc_bn_fallback_impl,
    static_argnames=tuple(s for s in _STATIC if s != "bn_fused"))


class FCLayerPallas:
    """Pallas-TPU FC_Layer: Linear (+ optional BatchNorm1d) + activation.

    Weight transpose / cast / pad happen ONCE here (not per forward call), so
    the per-call path is a single fused pallas_call plus, at most, an x pad.
    """

    def __init__(self, weight, bias, *, bn=False, activate='relu', dropout=0.0,
                 compute_dtype=None, out_dtype=None, eps=1e-5,
                 tm_cap=256, tn_cap=512, tk_cap=1024,
                 weight_buffers=2, bn_fused_max_bytes=None):
        if activate not in ('relu', 'sigmoid', 'exp', 'softplus', 'tanh'):
            raise ValueError(f"unknown activation: {activate}")
        if dropout != 0.0:
            # TODO(synk): training-mode dropout (p != 0) needs pltpu.prng_seed +
            # pltpu.stateful_bernoulli; the module default p=0.0 is a no-op.
            raise NotImplementedError("dropout != 0.0 is not implemented")

        weight = jnp.asarray(weight)
        bias = jnp.asarray(bias)
        f_out, f_in = weight.shape
        self.f_in, self.f_out = int(f_in), int(f_out)
        self.bn, self.activate, self.eps = bool(bn), activate, float(eps)
        self.out_dtype = None if out_dtype is None else jnp.dtype(out_dtype)
        self.tm_cap = int(tm_cap)
        self.weight_buffers = int(weight_buffers)

        # VMEM budget: detected capacity minus Mosaic headroom
        # (~112 MiB on v5e/v6e, ~48 MiB on v7x or when detection fails).
        self.vmem_cap = _detect_vmem_cap()
        self.bn_fused_max_bytes = (self.vmem_cap if bn_fused_max_bytes is None
                                   else int(bn_fused_max_bytes))

        # ---- static K / N tiling, decided once per layer ----
        if self.bn:
            tk_cap = min(tk_cap, 512)  # keep the (B, TK) x tile small for fused BN
        self.tk, self.Kp = _pick_tile(self.f_in, tk_cap, 128)
        self.tn, self.Np = _pick_tile(self.f_out, tn_cap, 128)
        # Megacore heuristic: prefer >= 2 N blocks when N allows it so both v7x
        # TensorCores get work (near-free on 1-TC chips).
        if self.tn == self.Np and self.Np % 128 == 0 and self.Np >= 256:
            t = (self.Np // 2) // 128 * 128
            while t > 128 and self.Np % t != 0:
                t -= 128
            if t >= 128 and self.Np % t == 0:
                self.tn = t

        # ---- one-time weight / bias preparation (transpose + cast + pad) ----
        w_t = weight.T                                   # (f_in, f_out): plain A@B
        if compute_dtype is not None:
            w_t = w_t.astype(compute_dtype)
        if (self.Kp, self.Np) != (self.f_in, self.f_out):
            w_t = jnp.pad(w_t, ((0, self.Kp - self.f_in),
                                (0, self.Np - self.f_out)))
        b2 = bias.astype(jnp.float32).reshape(1, self.f_out)
        if self.Np != self.f_out:
            b2 = jnp.pad(b2, ((0, 0), (0, self.Np - self.f_out)))
        self.w = w_t
        self.b = b2

    def __call__(self, x):
        B = x.shape[0]
        out_dtype = (self.out_dtype if self.out_dtype is not None
                     else jnp.dtype(x.dtype))
        common = dict(f_out=self.f_out, tk=self.tk, tn=self.tn,
                      tm_cap=self.tm_cap, eps=self.eps, out_dtype=out_dtype,
                      vmem_cap=self.vmem_cap,
                      weight_buffers=self.weight_buffers)
        if self.bn:
            xb = jnp.dtype(self.w.dtype).itemsize
            ob = jnp.dtype(out_dtype).itemsize
            need = (2 * (B * self.tk * xb + self.tk * self.tn * xb
                         + self.tn * 4 + B * self.tn * ob)
                    + B * self.tn * 4)
            if need <= self.bn_fused_max_bytes:
                return _fc_forward(x, self.w, self.b, bn_fused=True,
                                   activate=self.activate, **common)
            return _fc_bn_fallback(x, self.w, self.b, activate=self.activate,
                                   **common)
        return _fc_forward(x, self.w, self.b, bn_fused=False,
                           activate=self.activate, **common)


def _reference_forward(x, weight, bias, *, bn=False, activate='relu', eps=1e-5):
    y = x @ weight.T + bias
    if bn:
        mean = jnp.mean(y, axis=0, keepdims=True)
        var = jnp.mean((y - mean) ** 2, axis=0, keepdims=True)
        y = (y - mean) / jnp.sqrt(var + eps)
    return _ACTS[activate](y)


if __name__ == "__main__":
    def make_params(key, B, IN_F, OUT_F):
        kx, kw, kb = jax.random.split(key, 3)
        bound = 1.0 / jnp.sqrt(jnp.float32(IN_F))
        weight = jax.random.uniform(kw, (OUT_F, IN_F), jnp.float32, -bound, bound)
        bias = jax.random.uniform(kb, (OUT_F,), jnp.float32, -bound, bound)
        x = jax.random.normal(kx, (B, IN_F), jnp.float32)
        return x, weight, bias

    ok = True

    def check(tag, out, ref, atol, rtol):
        global ok
        if not jnp.allclose(out, ref, atol=atol, rtol=rtol):
            ok = False
            print(f"MISMATCH {tag} max_err={float(jnp.max(jnp.abs(out - ref)))}")

    # 1) Module-scale shapes (single exact-dim block): batch=8, 32 -> 64.
    x, w, b = make_params(jax.random.PRNGKey(0), 8, 32, 64)
    for bn, act in [(False, 'relu'), (True, 'tanh'), (False, 'sigmoid'),
                    (True, 'softplus'), (False, 'exp')]:
        layer = FCLayerPallas(w, b, bn=bn, activate=act)
        out = jax.block_until_ready(layer(x))
        check(f"f32 bn={bn} act={act}", out,
              _reference_forward(x, w, b, bn=bn, activate=act), 1e-4, 1e-4)

    # 2) Multi-tile grid (exercises M/N/K tiling + accumulator): 16 x 256 -> 256.
    x2, w2, b2 = make_params(jax.random.PRNGKey(1), 16, 256, 256)
    for bn, act in [(False, 'relu'), (True, 'tanh')]:
        layer = FCLayerPallas(w2, b2, bn=bn, activate=act,
                              tm_cap=8, tn_cap=128, tk_cap=128)
        out = jax.block_until_ready(layer(x2))
        check(f"tiled f32 bn={bn} act={act}", out,
              _reference_forward(x2, w2, b2, bn=bn, activate=act), 1e-4, 1e-4)

    # 3) bf16 MXU inputs with f32 accumulation (looser tolerance).
    layer = FCLayerPallas(w2, b2, activate='relu', compute_dtype=jnp.bfloat16)
    out = jax.block_until_ready(layer(x2))
    check("bf16", out, _reference_forward(x2, w2, b2, activate='relu'),
          5e-2, 5e-2)

    # 4) bn=True large-batch fallback path (forced): tiled matmul + XLA stats.
    layer = FCLayerPallas(w2, b2, bn=True, activate='tanh', bn_fused_max_bytes=0)
    out = jax.block_until_ready(layer(x2))
    check("bn fallback", out,
          _reference_forward(x2, w2, b2, bn=True, activate='tanh'), 1e-4, 1e-4)

    if ok:
        print("KERNEL_OK")
</pallas_src>

<mosaic_0001>
module attributes {stable_mosaic.version = 11 : i64} {
  func.func @kernel(%arg0: i32, %arg1: i32, %arg2: i32, %arg3: memref<8x32xf32, #tpu.memory_space<vmem>>, %arg4: memref<32x64xf32, #tpu.memory_space<vmem>>, %arg5: memref<1x64xf32, #tpu.memory_space<vmem>>, %arg6: memref<8x64xf32, #tpu.memory_space<vmem>>, %arg7: memref<8x64xf32, #tpu.memory_space<vmem>>) attributes {dimension_semantics = [#tpu.dimension_semantics<parallel>, #tpu.dimension_semantics<parallel>, #tpu.dimension_semantics<arbitrary>], iteration_bounds = array<i64: 1, 1, 1>, scalar_prefetch = 0 : i64, scratch_operands = 1 : i64, tpu.core_type = #tpu.core_type<tc>, window_params = [{transform_indices = @transform_0, window_bounds = array<i64: 8, 32>}, {transform_indices = @transform_1, window_bounds = array<i64: 32, 64>}, {transform_indices = @transform_2, window_bounds = array<i64: 1, 64>}, {transform_indices = @transform_3, window_bounds = array<i64: 8, 64>}]} {
    %c0_i32 = arith.constant 0 : i32
    %0 = arith.cmpi eq, %arg2, %c0_i32 : i32
    %1 = arith.extui %0 : i1 to i32
    %c0_i32_0 = arith.constant 0 : i32
    %2 = arith.cmpi ne, %1, %c0_i32_0 : i32
    scf.if %2 {
      %cst_10 = arith.constant 0.000000e+00 : f32
      %12 = vector.broadcast %cst_10 : f32 to vector<8x64xf32>
      %c0_11 = arith.constant 0 : index
      %c0_12 = arith.constant 0 : index
      %13 = vector.load %arg7[%c0_11, %c0_12] : memref<8x64xf32, #tpu.memory_space<vmem>>, vector<8x64xf32>
      tpu.vector_store %arg7[%c0_11, %c0_12], %12 {strides = array<i32>} : memref<8x64xf32, #tpu.memory_space<vmem>>, vector<8x64xf32>,
    } else {
    }
    %c0 = arith.constant 0 : index
    %c0_1 = arith.constant 0 : index
    %3 = vector.load %arg7[%c0, %c0_1] : memref<8x64xf32, #tpu.memory_space<vmem>>, vector<8x64xf32>
    %c0_2 = arith.constant 0 : index
    %c0_3 = arith.constant 0 : index
    %4 = vector.load %arg3[%c0_2, %c0_3] : memref<8x32xf32, #tpu.memory_space<vmem>>, vector<8x32xf32>
    %c0_4 = arith.constant 0 : index
    %c0_5 = arith.constant 0 : index
    %5 = vector.load %arg4[%c0_4, %c0_5] : memref<32x64xf32, #tpu.memory_space<vmem>>, vector<32x64xf32>
    %cst = arith.constant dense<0.000000e+00> : vector<8x64xf32>
    %6 = tpu.matmul %4, %5, %cst {dimension_numbers = #tpu.dot_dimension_numbers<[1], [0], [0], [1], [0, 0, 1, 1], [], []>} : vector<8x32xf32>, vector<32x64xf32>, vector<8x64xf32> -> vector<8x64xf32>
    %7 = arith.addf %3, %6 : vector<8x64xf32>
    %c0_6 = arith.constant 0 : index
    %c0_7 = arith.constant 0 : index
    %8 = vector.load %arg7[%c0_6, %c0_7] : memref<8x64xf32, #tpu.memory_space<vmem>>, vector<8x64xf32>
    tpu.vector_store %arg7[%c0_6, %c0_7], %7 {strides = array<i32>} : memref<8x64xf32, #tpu.memory_space<vmem>>, vector<8x64xf32>,
    %c0_i32_8 = arith.constant 0 : i32
    %9 = arith.cmpi eq, %arg2, %c0_i32_8 : i32
    %10 = arith.extui %9 : i1 to i32
    %c0_i32_9 = arith.constant 0 : i32
    %11 = arith.cmpi ne, %10, %c0_i32_9 : i32
    scf.if %11 {
      %c0_10 = arith.constant 0 : index
      %c0_11 = arith.constant 0 : index
      %12 = vector.load %arg7[%c0_10, %c0_11] : memref<8x64xf32, #tpu.memory_space<vmem>>, vector<8x64xf32>
      %c0_12 = arith.constant 0 : index
      %c0_13 = arith.constant 0 : index
      %13 = vector.load %arg5[%c0_12, %c0_13] : memref<1x64xf32, #tpu.memory_space<vmem>>, vector<1x64xf32>
      %14 = vector.broadcast %13 : vector<1x64xf32> to vector<8x64xf32>
      %15 = arith.addf %12, %14 : vector<8x64xf32>
      %cst_14 = arith.constant 0.000000e+00 : f32
      %16 = vector.broadcast %cst_14 : f32 to vector<8x64xf32>
      %17 = arith.maximumf %15, %16 : vector<8x64xf32>
      %c0_15 = arith.constant 0 : index
      %c0_16 = arith.constant 0 : index
      %18 = vector.load %arg6[%c0_15, %c0_16] : memref<8x64xf32, #tpu.memory_space<vmem>>, vector<8x64xf32>
      tpu.vector_store %arg6[%c0_15, %c0_16], %17 {strides = array<i32>} : memref<8x64xf32, #tpu.memory_space<vmem>>, vector<8x64xf32>,
    } else {
    }
    return
  }
  func.func @transform_0(%arg0: i32, %arg1: i32, %arg2: i32) -> (i32, i32) {
    %c0_i32 = arith.constant 0 : i32
    return %arg0, %arg2 : i32, i32
  }
  func.func @transform_1(%arg0: i32, %arg1: i32, %arg2: i32) -> (i32, i32) {
    %c0_i32 = arith.constant 0 : i32
    return %arg2, %arg1 : i32, i32
  }
  func.func @transform_2(%arg0: i32, %arg1: i32, %arg2: i32) -> (i32, i32) {
    %c0_i32 = arith.constant 0 : i32
    %c0_i32_0 = arith.constant 0 : i32
    return %c0_i32, %arg1 : i32, i32
  }
  func.func @transform_3(%arg0: i32, %arg1: i32, %arg2: i32) -> (i32, i32) {
    %c0_i32 = arith.constant 0 : i32
    return %arg0, %arg1 : i32, i32
  }
}

</mosaic_0001>

<llo_original>
// kernel: _fc_forward_impl.1
$region0: #{_fc_forward_impl.1}
  #allocation0 [shape = 'u32[]', space=smem, size = 0x4, offset = 0x4, fixed_abs, tag = 'smem constant byte address 0x4 - core index']
  #allocation1 [shape = 'u32[144,128]{1,0:T(1,128)}', space=vmem, size = 0x12000, scoped, tag = 'internal scratch']
  #allocation2 [shape = 'f32[8,64]{1,0:T(8,128)}', space=vmem, size = 0x1000, scoped, tag = 'scratch operand']
  %s0 = inlined_call_operand.hbm [shape: f32[8,32], index: 0, kind: input, shape index: {}]
  %s1 = inlined_call_operand.hbm [shape: f32[32,64], index: 1, kind: input, shape index: {}]
  %s2 = inlined_call_operand.vmem [shape: f32[1,64], index: 2, kind: input, shape index: {}]
  %s3 = inlined_call_operand.hbm [shape: f32[8,64], index: 3, kind: output, shape index: {}]
  %s4 = sld [smem:[#allocation0]]
  $region38: #{_fc_forward_impl.1} parent=0
    _
  %s6 = ssub.s32 1, %s4
  %s7 = scalar_select 0, %s6, %s4
  $region1: #{_fc_forward_impl.1} parent=0
    #allocation3 [shape = 'u8[4096]{0}', space=vmem, size = 0x1000, scoped, tag = 'input window, operand 0, single buffered']
    #allocation4 [shape = 's32[1]{0}', space=sflag, size = 0x4, scoped, tag = 'scoped memory for _fc_forward_impl.1']
    #allocation5 [shape = 's32[1]{0}', space=sflag, size = 0x4, scoped, tag = 'scoped memory for _fc_forward_impl.1']
    #allocation6 [shape = 'u8[16384]{0}', space=vmem, size = 0x4000, scoped, tag = 'input window, operand 1, single buffered']
    #allocation7 [shape = 's32[1]{0}', space=sflag, size = 0x4, scoped, tag = 'scoped memory for _fc_forward_impl.1']
    #allocation8 [shape = 'u8[4096]{0}', space=vmem, size = 0x1000, scoped, tag = 'output window, operand 0, single buffered']
    %8 = vsyncpa [#allocation4], 0
    %9 = vsyncpa [#allocation7], 0
    %10 = vsyncpa [#allocation5], 0
    // Predicated region
    $region2: #{_fc_forward_impl.1} parent=1 // pred_check
      _
    $region3: #{_fc_forward_impl.1} parent=1 // pred_check_branch
      %12 = sbr.rel (0) target = $region5
    $region4: #{_fc_forward_impl.1} parent=1 // pred_region
      %s14 = ssub.s32 128, 128
      %15 = vsyncadd [#allocation4], %s14
      %s17 = sshll.u32 [#allocation3], 4
      %s18 = int_to_ptr.vmem [resolvable:$true] %s17
      %20 = dma.hbm_to_vmem [thread:$0]  %s0, 128, %s18, [#allocation4]
    $region5: #{_fc_forward_impl.1} parent=1 // pred_fallthru
      _
    // Predicated region
    $region6: #{_fc_forward_impl.1} parent=1 // pred_check
      _
    $region7: #{_fc_forward_impl.1} parent=1 // pred_check_branch
      %22 = sbr.rel (0) target = $region9
    $region8: #{_fc_forward_impl.1} parent=1 // pred_region
      %s24 = ssub.s32 512, 512
      %25 = vsyncadd [#allocation7], %s24
      %s26 = sshll.u32 [#allocation6], 4
      %s27 = int_to_ptr.vmem [resolvable:$true] %s26
      %32 = dma.hbm_to_vmem [thread:$0]  %s1, 512, %s27, [#allocation7], 128, 128, 8
    $region9: #{_fc_forward_impl.1} parent=1 // pred_fallthru
      _
    // Predicated region
    $region10: #{_fc_forward_impl.1} parent=1 // pred_check
      _
    $region11: #{_fc_forward_impl.1} parent=1 // pred_check_branch
      %34 = sbr.rel (0) target = $region13
    $region12: #{_fc_forward_impl.1} parent=1 // pred_region
      _
    $region13: #{_fc_forward_impl.1} parent=1 // pred_fallthru
      _
    // Predicated region
    $region14: #{_fc_forward_impl.1} parent=1 // pred_check
      _
    $region15: #{_fc_forward_impl.1} parent=1 // pred_check_branch
      %36 = sbr.rel (0) target = $region17
    $region16: #{_fc_forward_impl.1} parent=1 // pred_region
      %37 = dma.done [#allocation4], 128
    $region17: #{_fc_forward_impl.1} parent=1 // pred_fallthru
      _
    // Predicated region
    $region18: #{_fc_forward_impl.1} parent=1 // pred_check
      _
    $region19: #{_fc_forward_impl.1} parent=1 // pred_check_branch
      %39 = sbr.rel (0) target = $region21
    $region20: #{_fc_forward_impl.1} parent=1 // pred_region
      %40 = dma.done [#allocation7], 512
    $region21: #{_fc_forward_impl.1} parent=1 // pred_fallthru
      _
    %p41 = scmp.eq.s32.totalorder 0, 0
    // Predicated region
    $region22: #{_fc_forward_impl.1} parent=1 // pred_check
      %p42 = pneg %p41
    $region23: #{_fc_forward_impl.1} parent=1 // pred_check_branch
      %44 = sbr.rel (%p42) target = $region25
    $region24: #{_fc_forward_impl.1} parent=1 // pred_region
      %vm45 = vcmask 523264
      %46 = vst.msk [vmem:[#allocation2] sm:$0xff] %vm45, 0.0
    $region25: #{_fc_forward_impl.1} parent=1 // pred_fallthru
      _
    %v47 = vld [vmem:[#allocation2] sm:$0xff]
    %v48 = vld [vmem:[#allocation3] sm:$0xff]
    %v49 = vld [vmem:[#allocation6] sm:$0xff]
    %v50 = vld [vmem:[#allocation6 + $0x8] sm:$0xff]
    %v51 = vld [vmem:[#allocation6 + $0x10] sm:$0xff]
    %v52 = vld [vmem:[#allocation6 + $0x18] sm:$0xff]
    %vm53 = vcmask 261120
    %v55 = vsel %vm53, %v48, 0
    %57 = vmatprep.subr.mxu0 0.0
    %58 = vmatpush1.msra.mxu0 %v49
    %59 = vmatprep.subr.mxu0 0.0
    %60 = vmatpush1.msra.mxu0 %v50
    %61 = vmatprep.subr.mxu0 0.0
    %62 = vmatpush1.msra.mxu0 %v51
    %63 = vmatprep.subr.mxu0 0.0
    %64 = vmatpush1.msra.mxu0 %v52
    %65 = vmatprep.subr.mxu0 0.0
    %66 = vmatpush1.msra.mxu0 0.0
    %67 = vmatprep.subr.mxu0 0.0
    %68 = vmatpush1.msra.mxu0 0.0
    %69 = vmatprep.subr.mxu0 0.0
    %70 = vmatpush1.msra.mxu0 0.0
    %71 = vmatprep.subr.mxu0 0.0
    %72 = vmatpush1.msra.mxu0 0.0
    %73 = vmatprep.subr.mxu0 0.0
    %74 = vmatpush1.msra.mxu0 0.0
    %75 = vmatprep.subr.mxu0 0.0
    %76 = vmatpush1.msra.mxu0 0.0
    %77 = vmatprep.subr.mxu0 0.0
    %78 = vmatpush1.msra.mxu0 0.0
    %79 = vmatprep.subr.mxu0 0.0
    %80 = vmatpush1.msra.mxu0 0.0
    %81 = vmatprep.subr.mxu0 0.0
    %82 = vmatpush1.msra.mxu0 0.0
    %83 = vmatprep.subr.mxu0 0.0
    %84 = vmatpush1.msra.mxu0 0.0
    %85 = vmatprep.subr.mxu0 0.0
    %86 = vmatpush1.msra.mxu0 0.0
    %87 = vmatprep.subr.mxu0 0.0
    %88 = vmatpush1.msra.mxu0 0.0
    %89 = vmatprep.subr.mxu0 0.0
    %90 = vmatpush1.msra.mxu0 0.0
    %91 = vmatprep.subr.mxu0 0.0
    %92 = vmatpush1.msra.mxu0 0.0
    %93 = vmatprep.subr.mxu0 0.0
    %94 = vmatpush1.msra.mxu0 0.0
    %95 = vmatprep.subr.mxu0 0.0
    %96 = vmatpush1.msra.mxu0 0.0
    %97 = vmatprep.subr.mxu0 0.0
    %98 = vmatpush1.msra.mxu0 0.0
    %99 = vmatprep.subr.mxu0 0.0
    %100 = vmatpush1.msra.mxu0 0.0
    %101 = vmatprep.subr.mxu0 0.0
    %102 = vmatpush1.msra.mxu0 0.0
    %103 = vmatprep.subr.mxu0 0.0
    %104 = vmatpush1.msra.mxu0 0.0
    %105 = vmatprep.subr.mxu0 0.0
    %106 = vmatpush1.msra.mxu0 0.0
    %107 = vmatprep.subr.mxu0 0.0
    %108 = vmatpush1.msra.mxu0 0.0
    %109 = vmatprep.subr.mxu0 0.0
    %110 = vmatpush1.msra.mxu0 0.0
    %111 = vmatprep.subr.mxu0 0.0
    %112 = vmatpush1.msra.mxu0 0.0
    %113 = vmatprep.subr.mxu0 0.0
    %114 = vmatpush1.msra.mxu0 0.0
    %115 = vmatprep.subr.mxu0 0.0
    %116 = vmatpush1.msra.mxu0 0.0
    %117 = vmatprep.subr.mxu0 0.0
    %118 = vmatpush1.msra.mxu0 0.0
    %119 = vmatprep.subr.mxu0 0.0
    %120 = vmatpush1.msra.mxu0 0.0
    %121 = vmatprep.mubr.f32.mxu0 0.0
    %122 = vmatmul.mubr.f32.gmra.mrb[0].mxu0 %v55
    %v123 = vpop.f32.mrb[0].mxu0
    %v124 = vadd.f32 0.0, %v123
    %v125 = vpop.f32.mrb[0].mxu0
    %126 = vdwg.mxu0
    %v127 = vadd.f32 %v47, %v124
    %vm128 = vcmask 523264
    %129 = vst.msk [vmem:[#allocation2] sm:$0xff] %vm128, %v127
    // Predicated region
    $region26: #{_fc_forward_impl.1} parent=1 // pred_check
      %p130 = pneg %p41
    $region27: #{_fc_forward_impl.1} parent=1 // pred_check_branch
      %132 = sbr.rel (%p130) target = $region29
    $region28: #{_fc_forward_impl.1} parent=1 // pred_region
      %v133 = vld [vmem:[#allocation2] sm:$0xff]
      %v134 = vld [vmem:[%s2] sm:$0x1]
      %v136 = vlaneseq
      %v137 = vshrl.u32 %v136, 7
      %v138 = vsub.s32 0, %v137
      %v139 = vrot.slane %v134, %v138
      %v141 = vadd.f32 %v133, %v139
      %v142 = vmax.f32 %v141, 0.0
      %143 = vst.msk [vmem:[#allocation8] sm:$0xff] %vm128, %v142
    $region29: #{_fc_forward_impl.1} parent=1 // pred_fallthru
      _
    // Predicated region
    $region30: #{_fc_forward_impl.1} parent=1 // pred_check
      _
    $region31: #{_fc_forward_impl.1} parent=1 // pred_check_branch
      %145 = sbr.rel (0) target = $region33
    $region32: #{_fc_forward_impl.1} parent=1 // pred_region
      %s147 = ssub.s32 128, 128
      %148 = vsyncadd [#allocation5], %s147
      %s150 = sshll.u32 [#allocation8], 4
      %s151 = int_to_ptr.vmem [resolvable:$true] %s150
      %153 = dma.vmem_to_hbm [thread:$0]  %s151, 128, %s3, [#allocation5]
    $region33: #{_fc_forward_impl.1} parent=1 // pred_fallthru
      _
    // Predicated region
    $region34: #{_fc_forward_impl.1} parent=1 // pred_check
      _
    $region35: #{_fc_forward_impl.1} parent=1 // pred_check_branch
      %155 = sbr.rel (0) target = $region37
    $region36: #{_fc_forward_impl.1} parent=1 // pred_region
      %156 = dma.done [#allocation5], 128
    $region37: #{_fc_forward_impl.1} parent=1 // pred_fallthru
      _
    %157 = vsyncpa [#allocation4], 1
    %158 = vsyncpa [#allocation7], 1
    %159 = vsyncpa [#allocation5], 1

</llo_original>
